<compile_context>
chip_gen: v5e
topology: v5e:2x2
jax: 0.10.0
libtpu: 0.0.40
codegen_flags: <defaults>
</compile_context>

<pallas_src>
import jax
import jax.numpy as jnp
from jax.experimental import pallas as pl
from jax.experimental.pallas import tpu as pltpu

LANE = 128      # TPU vreg lane width (last dim)
SUBLANE = 8     # f32 sublane granularity


def _round_up(x, m):
    return (x + m - 1) // m * m


def _ff_kernel(x_ref, wf_ref, bf_ref, w2_ref, b2_ref, w3_ref, b3_ref, o_ref):
    """Fused FF: relu(relu(relu(xW1+b1)W2+b2)W3+b3) + (xWs+bs).

    wf = [W1.T | Ws.T] (output side zero-padded to Dp), so ONE MXU matmul on x
    produces both the block input and the shortcut.  All matmuls accumulate in
    f32; bias add / ReLU / residual stay f32 on the VPU.
    """
    mm_dtype = wf_ref.dtype          # f32, or bf16 when use_bf16=True
    dp = w2_ref.shape[0]
    d_out = o_ref.shape[-1]

    x = x_ref[...].astype(mm_dtype)  # no-op in f32 mode; in-kernel cast for bf16

    # Fused first layer + shortcut: one 2*Dp-wide MXU matmul.
    y = jnp.dot(x, wf_ref[...], preferred_element_type=jnp.float32) + bf_ref[...]
    h = jnp.maximum(y[:, :dp], 0.0).astype(mm_dtype)   # block path
    sc = y[:, dp:]                                     # shortcut path (no ReLU)

    h = jnp.dot(h, w2_ref[...], preferred_element_type=jnp.float32) + b2_ref[...]
    h = jnp.maximum(h, 0.0).astype(mm_dtype)

    h = jnp.dot(h, w3_ref[...], preferred_element_type=jnp.float32) + b3_ref[...]
    h = jnp.maximum(h, 0.0)

    o_ref[...] = (h + sc)[:, :d_out].astype(o_ref.dtype)


def init_ff_params(key, input_dim):
    """Xavier-uniform weights (as in deepGCFX.init_emb), zero biases.

    PyTorch Linear weight is [out, in]; we store its transpose.  Only the OUTPUT
    side of each weight is zero-padded to Dp = round_up(D, 128) so the in-kernel
    intermediates are lane-dense; x and the final output stay unpadded.
    Zero padding keeps the math exact (padded lanes stay 0 through bias+ReLU).
    """
    d = input_dim
    dp = _round_up(max(d, LANE), LANE)
    limit = (6.0 / (d + d)) ** 0.5
    k1, k2, k3, ks = jax.random.split(key, 4)

    def lin_rect(k):                      # first layer / shortcut: [d, dp]
        wt = jax.random.uniform(k, (d, d), jnp.float32, -limit, limit)
        return jnp.zeros((d, dp), jnp.float32).at[:, :d].set(wt)

    def lin_square(k):                    # inner layers: [dp, dp]
        wt = jax.random.uniform(k, (d, d), jnp.float32, -limit, limit)
        return jnp.zeros((dp, dp), jnp.float32).at[:d, :d].set(wt)

    wf = jnp.concatenate([lin_rect(k1), lin_rect(ks)], axis=1)   # [d, 2*dp]
    bf = jnp.zeros((1, 2 * dp), jnp.float32)                     # zero per init_emb
    w2 = lin_square(k2)
    w3 = lin_square(k3)
    b2 = jnp.zeros((1, dp), jnp.float32)
    b3 = jnp.zeros((1, dp), jnp.float32)

    # NOTE: padded weight rows/cols and padded bias lanes MUST stay exactly zero
    # (they do here); if params are ever imported from PyTorch, re-pad on load.
    return dict(
        wf=wf, bf=bf, w2=w2, b2=b2, w3=w3, b3=b3,
        # bf16 copies pre-cast ONCE (no per-call HBM cast pass); used with
        # use_bf16=True (recommended on v6e/v7x MXUs).
        wf_bf16=wf.astype(jnp.bfloat16),
        w2_bf16=w2.astype(jnp.bfloat16),
        w3_bf16=w3.astype(jnp.bfloat16),
    )


def ff_forward(x, params, *, row_tile=1024, use_bf16=False, out_dtype=jnp.float32):
    """FF forward. x: [N, D] f32. Returns [N, D] in out_dtype."""
    n, d = x.shape
    dp = params["w2"].shape[0]
    assert row_tile % SUBLANE == 0

    wf = params["wf_bf16"] if use_bf16 else params["wf"]
    w2 = params["w2_bf16"] if use_bf16 else params["w2"]
    w3 = params["w3_bf16"] if use_bf16 else params["w3"]
    bf, b2, b3 = params["bf"], params["b2"], params["b3"]

    if n <= row_tile:
        # Small case: grid-less, no pipeline machinery, whole problem in VMEM.
        vmem = pl.BlockSpec(memory_space=pltpu.MemorySpace.VMEM)
        return pl.pallas_call(
            _ff_kernel,
            out_shape=jax.ShapeDtypeStruct((n, d), out_dtype),
            in_specs=[vmem] * 7,
            out_specs=vmem,
        )(x, wf, bf, w2, b2, w3, b3)

    # Large case: tile only over rows; weights/biases stay VMEM-resident via
    # constant index_maps (fetched once).  n > row_tile guarantees >= 2 tiles,
    # so the "parallel" row axis keeps both v7x TensorCores busy.
    n_pad = _round_up(n, row_tile)
    if n_pad != n:
        x = jnp.pad(x, ((0, n_pad - n), (0, 0)))

    x_spec = pl.BlockSpec((row_tile, d), lambda i: (i, 0))
    wf_spec = pl.BlockSpec((d, 2 * dp), lambda i: (0, 0))
    bf_spec = pl.BlockSpec((1, 2 * dp), lambda i: (0, 0))
    w_spec = pl.BlockSpec((dp, dp), lambda i: (0, 0))
    b_spec = pl.BlockSpec((1, dp), lambda i: (0, 0))
    o_spec = pl.BlockSpec((row_tile, d), lambda i: (i, 0))

    # Explicit VMEM budget: >= 32 MiB (covers v5e's 16 MiB default being too
    # small for big tiles) but capped at 48 MiB (< v7x's 64 MiB physical VMEM).
    mm_itemsize = 2 if use_bf16 else 4
    out_itemsize = 2 if out_dtype in (jnp.bfloat16, jnp.float16) else 4
    weight_bytes = (d * 2 * dp + 2 * dp * dp) * mm_itemsize + 4 * dp * 4
    io_bytes = row_tile * d * (x.dtype.itemsize + out_itemsize)
    scratch_bytes = row_tile * 4 * dp * 4            # f32 intermediates
    est = 2 * (2 * (weight_bytes + io_bytes) + scratch_bytes)
    vmem_limit = int(min(max(est, 32 << 20), 48 << 20))

    out = pl.pallas_call(
        _ff_kernel,
        out_shape=jax.ShapeDtypeStruct((n_pad, d), out_dtype),
        grid=(n_pad // row_tile,),
        in_specs=[x_spec, wf_spec, bf_spec, w_spec, b_spec, w_spec, b_spec],
        out_specs=o_spec,
        compiler_params=pltpu.CompilerParams(
            dimension_semantics=("parallel",),
            vmem_limit_bytes=vmem_limit,
        ),
    )(x, wf, bf, w2, b2, w3, b3)
    return out[:n] if n_pad != n else out


# Jitted wrapper: any pad / slice / dtype plumbing around the kernel fuses with
# the caller instead of launching standalone XLA pad/slice kernels.
ff_forward_jit = jax.jit(
    ff_forward, static_argnames=("row_tile", "use_bf16", "out_dtype"))


def ff_reference(x, params):
    """Plain-JAX reference of FF.forward (unpadded weights extracted from params)."""
    d = x.shape[1]
    dp = params["w2"].shape[0]
    wf, bfb = params["wf"], params["bf"]
    w1, b1 = wf[:, :d], bfb[:, :d]
    ws, bs = wf[:, dp:dp + d], bfb[:, dp:dp + d]
    w2, b2 = params["w2"][:d, :d], params["b2"][:, :d]
    w3, b3 = params["w3"][:d, :d], params["b3"][:, :d]
    h = jnp.maximum(x @ w1 + b1, 0.0)
    h = jnp.maximum(h @ w2 + b2, 0.0)
    h = jnp.maximum(h @ w3 + b3, 0.0)
    return h + (x @ ws + bs)


if __name__ == "__main__":
    key = jax.random.PRNGKey(0)
    k_p, k_x, k_xb = jax.random.split(key, 3)

    hidden_dim = 32   # FF(input_dim=hidden_dim) inside deepGCFX
    n_nodes = 10      # small node batch

    params = init_ff_params(k_p, hidden_dim)
    x = jax.random.normal(k_x, (n_nodes, hidden_dim), dtype=jnp.float32)

    # 1) small path: grid-less, fully fused FF resident in VMEM
    y = ff_forward_jit(x, params)
    jax.block_until_ready(y)
    ref = ff_reference(x, params)
    assert y.shape == (n_nodes, hidden_dim)
    assert jnp.allclose(y, ref, atol=1e-5, rtol=1e-5)

    # 2) row-tiled path: 4096 rows / 1024-row tiles -> 4 parallel tiles
    #    (>= 2, so both v7x TensorCores get work); weights VMEM-resident
    n_big = 4096
    xb = jax.random.normal(k_xb, (n_big, hidden_dim), dtype=jnp.float32)
    yb = ff_forward_jit(xb, params)
    jax.block_until_ready(yb)
    refb = ff_reference(xb, params)
    assert yb.shape == (n_big, hidden_dim)
    assert jnp.allclose(yb, refb, atol=1e-5, rtol=1e-5)

    # 3) bf16 MXU inputs (recommended on v6e/v7x), f32 accumulation -> loose tolerance
    yb16 = ff_forward_jit(xb, params, use_bf16=True)
    jax.block_until_ready(yb16)
    assert jnp.allclose(yb16, refb, atol=1e-1, rtol=1e-1)

    print("KERNEL_OK")
</pallas_src>

<mosaic_0001>
module attributes {stable_mosaic.version = 11 : i64} {
  func.func @_ff_kernel(%arg0: memref<10x32xf32, #tpu.memory_space<vmem>>, %arg1: memref<32x256xf32, #tpu.memory_space<vmem>>, %arg2: memref<1x256xf32, #tpu.memory_space<vmem>>, %arg3: memref<128x128xf32, #tpu.memory_space<vmem>>, %arg4: memref<1x128xf32, #tpu.memory_space<vmem>>, %arg5: memref<128x128xf32, #tpu.memory_space<vmem>>, %arg6: memref<1x128xf32, #tpu.memory_space<vmem>>, %arg7: memref<10x32xf32, #tpu.memory_space<vmem>>) attributes {dimension_semantics = [], scalar_prefetch = 0 : i64, scratch_operands = 0 : i64, tpu.core_type = #tpu.core_type<tc>} {
    %c0 = arith.constant 0 : index
    %c0_0 = arith.constant 0 : index
    %0 = vector.load %arg0[%c0, %c0_0] : memref<10x32xf32, #tpu.memory_space<vmem>>, vector<10x32xf32>
    %c0_1 = arith.constant 0 : index
    %c0_2 = arith.constant 0 : index
    %1 = vector.load %arg1[%c0_1, %c0_2] : memref<32x256xf32, #tpu.memory_space<vmem>>, vector<32x256xf32>
    %cst = arith.constant dense<0.000000e+00> : vector<10x256xf32>
    %2 = tpu.matmul %0, %1, %cst {dimension_numbers = #tpu.dot_dimension_numbers<[1], [0], [0], [1], [0, 0, 1, 1], [], []>} : vector<10x32xf32>, vector<32x256xf32>, vector<10x256xf32> -> vector<10x256xf32>
    %c0_3 = arith.constant 0 : index
    %c0_4 = arith.constant 0 : index
    %3 = vector.load %arg2[%c0_3, %c0_4] : memref<1x256xf32, #tpu.memory_space<vmem>>, vector<1x256xf32>
    %4 = vector.broadcast %3 : vector<1x256xf32> to vector<10x256xf32>
    %5 = arith.addf %2, %4 : vector<10x256xf32>
    %6 = vector.extract_strided_slice %5 {offsets = [0, 0], sizes = [10, 128], strides = [1, 1]} : vector<10x256xf32> to vector<10x128xf32>
    %cst_5 = arith.constant 0.000000e+00 : f32
    %7 = vector.broadcast %cst_5 : f32 to vector<10x128xf32>
    %8 = arith.maximumf %6, %7 : vector<10x128xf32>
    %9 = vector.extract_strided_slice %5 {offsets = [0, 128], sizes = [10, 128], strides = [1, 1]} : vector<10x256xf32> to vector<10x128xf32>
    %c0_6 = arith.constant 0 : index
    %c0_7 = arith.constant 0 : index
    %10 = vector.load %arg3[%c0_6, %c0_7] : memref<128x128xf32, #tpu.memory_space<vmem>>, vector<128x128xf32>
    %cst_8 = arith.constant dense<0.000000e+00> : vector<10x128xf32>
    %11 = tpu.matmul %8, %10, %cst_8 {dimension_numbers = #tpu.dot_dimension_numbers<[1], [0], [0], [1], [0, 0, 1, 1], [], []>} : vector<10x128xf32>, vector<128x128xf32>, vector<10x128xf32> -> vector<10x128xf32>
    %c0_9 = arith.constant 0 : index
    %c0_10 = arith.constant 0 : index
    %12 = vector.load %arg4[%c0_9, %c0_10] : memref<1x128xf32, #tpu.memory_space<vmem>>, vector<1x128xf32>
    %13 = vector.broadcast %12 : vector<1x128xf32> to vector<10x128xf32>
    %14 = arith.addf %11, %13 : vector<10x128xf32>
    %cst_11 = arith.constant 0.000000e+00 : f32
    %15 = vector.broadcast %cst_11 : f32 to vector<10x128xf32>
    %16 = arith.maximumf %14, %15 : vector<10x128xf32>
    %c0_12 = arith.constant 0 : index
    %c0_13 = arith.constant 0 : index
    %17 = vector.load %arg5[%c0_12, %c0_13] : memref<128x128xf32, #tpu.memory_space<vmem>>, vector<128x128xf32>
    %cst_14 = arith.constant dense<0.000000e+00> : vector<10x128xf32>
    %18 = tpu.matmul %16, %17, %cst_14 {dimension_numbers = #tpu.dot_dimension_numbers<[1], [0], [0], [1], [0, 0, 1, 1], [], []>} : vector<10x128xf32>, vector<128x128xf32>, vector<10x128xf32> -> vector<10x128xf32>
    %c0_15 = arith.constant 0 : index
    %c0_16 = arith.constant 0 : index
    %19 = vector.load %arg6[%c0_15, %c0_16] : memref<1x128xf32, #tpu.memory_space<vmem>>, vector<1x128xf32>
    %20 = vector.broadcast %19 : vector<1x128xf32> to vector<10x128xf32>
    %21 = arith.addf %18, %20 : vector<10x128xf32>
    %cst_17 = arith.constant 0.000000e+00 : f32
    %22 = vector.broadcast %cst_17 : f32 to vector<10x128xf32>
    %23 = arith.maximumf %21, %22 : vector<10x128xf32>
    %24 = arith.addf %23, %9 : vector<10x128xf32>
    %25 = vector.extract_strided_slice %24 {offsets = [0, 0], sizes = [10, 32], strides = [1, 1]} : vector<10x128xf32> to vector<10x32xf32>
    %c0_18 = arith.constant 0 : index
    %c0_19 = arith.constant 0 : index
    %26 = vector.load %arg7[%c0_18, %c0_19] : memref<10x32xf32, #tpu.memory_space<vmem>>, vector<10x32xf32>
    tpu.vector_store %arg7[%c0_18, %c0_19], %25 {strides = array<i32>} : memref<10x32xf32, #tpu.memory_space<vmem>>, vector<10x32xf32>,
    return
  }
}

</mosaic_0001>

<llo_original>
// kernel: ff_forward.1
$region0: #{ff_forward.1}
  #allocation0 [shape = 'u32[]', space=smem, size = 0x4, offset = 0x4, fixed_abs, tag = 'smem constant byte address 0x4 - core index']
  #allocation1 [shape = 'u32[72,128]{1,0:T(1,128)}', space=vmem, size = 0x9000, scoped, tag = 'internal scratch']
  %s0 = inlined_call_operand.hbm [shape: f32[10,32], index: 0, kind: input, shape index: {}]
  %s1 = inlined_call_operand.hbm [shape: f32[32,256], index: 1, kind: input, shape index: {}]
  %s2 = inlined_call_operand.vmem [shape: f32[1,256], index: 2, kind: input, shape index: {}]
  %s3 = inlined_call_operand.hbm [shape: f32[128,128], index: 3, kind: input, shape index: {}]
  %s4 = inlined_call_operand.hbm [shape: f32[1,128], index: 4, kind: input, shape index: {}]
  %s5 = inlined_call_operand.hbm [shape: f32[128,128], index: 5, kind: input, shape index: {}]
  %s6 = inlined_call_operand.hbm [shape: f32[1,128], index: 6, kind: input, shape index: {}]
  %s7 = inlined_call_operand.hbm [shape: f32[10,32], index: 7, kind: output, shape index: {}]
  %s8 = sld [smem:[#allocation0]]
  $region62: #{ff_forward.1} parent=0
    _
  %s10 = ssub.s32 1, %s8
  %s11 = scalar_select 0, %s10, %s8
  $region1: #{ff_forward.1} parent=0
    #allocation2 [shape = 'u8[8192]{0}', space=vmem, size = 0x2000, scoped, tag = 'input window, operand 0, single buffered']
    #allocation3 [shape = 's32[1]{0}', space=sflag, size = 0x4, scoped, tag = 'scoped memory for ff_forward.1']
    #allocation4 [shape = 's32[1]{0}', space=sflag, size = 0x4, scoped, tag = 'scoped memory for ff_forward.1']
    #allocation5 [shape = 'u8[32768]{0}', space=vmem, size = 0x8000, scoped, tag = 'input window, operand 1, single buffered']
    #allocation6 [shape = 's32[1]{0}', space=sflag, size = 0x4, scoped, tag = 'scoped memory for ff_forward.1']
    #allocation7 [shape = 'u8[65536]{0}', space=vmem, size = 0x10000, scoped, tag = 'input window, operand 3, single buffered']
    #allocation8 [shape = 'u8[512]{0}', space=vmem, size = 0x400, scoped, tag = 'input window, operand 4, single buffered']
    #allocation9 [shape = 's32[1]{0}', space=sflag, size = 0x4, scoped, tag = 'scoped memory for ff_forward.1']
    #allocation10 [shape = 'u8[65536]{0}', space=vmem, size = 0x10000, scoped, tag = 'input window, operand 5, single buffered']
    #allocation11 [shape = 'u8[512]{0}', space=vmem, size = 0x400, scoped, tag = 'input window, operand 6, single buffered']
    #allocation12 [shape = 's32[1]{0}', space=sflag, size = 0x4, scoped, tag = 'scoped memory for ff_forward.1']
    #allocation13 [shape = 'u8[8192]{0}', space=vmem, size = 0x2000, scoped, tag = 'output window, operand 0, single buffered']
    %12 = vsyncpa [#allocation3], 0
    %13 = vsyncpa [#allocation6], 0
    %14 = vsyncpa [#allocation9], 0
    %15 = vsyncpa [#allocation12], 0
    %16 = vsyncpa [#allocation4], 0
    // Predicated region
    $region2: #{ff_forward.1} parent=1 // pred_check
      _
    $region3: #{ff_forward.1} parent=1 // pred_check_branch
      %18 = sbr.rel (0) target = $region5
    $region4: #{ff_forward.1} parent=1 // pred_region
      %20 = vsyncadd [#allocation3], 0
      %s21 = sshll.u32 %s0, 4
      %s22 = int_to_ptr.hbm [resolvable:$true] %s21
      %s23 = sshll.u32 [#allocation2], 4
      %s24 = int_to_ptr.vmem [resolvable:$true] %s23
      %29 = dma.hbm_to_vmem [thread:$0]  %s22, 256, %s24, [#allocation3], 128, 128, 8
    $region5: #{ff_forward.1} parent=1 // pred_fallthru
      _
    // Predicated region
    $region6: #{ff_forward.1} parent=1 // pred_check
      _
    $region7: #{ff_forward.1} parent=1 // pred_check_branch
      %31 = sbr.rel (0) target = $region9
    $region8: #{ff_forward.1} parent=1 // pred_region
      %33 = vsyncadd [#allocation6], 0
      %s34 = sshll.u32 %s1, 4
      %s35 = int_to_ptr.hbm [resolvable:$true] %s34
      %s36 = sshll.u32 [#allocation5], 4
      %s37 = int_to_ptr.vmem [resolvable:$true] %s36
      %42 = dma.hbm_to_vmem [thread:$0]  %s35, 1024, %s37, [#allocation6], 256, 256, 16
    $region9: #{ff_forward.1} parent=1 // pred_fallthru
      _
    // Predicated region
    $region10: #{ff_forward.1} parent=1 // pred_check
      _
    $region11: #{ff_forward.1} parent=1 // pred_check_branch
      %44 = sbr.rel (0) target = $region13
    $region12: #{ff_forward.1} parent=1 // pred_region
      _
    $region13: #{ff_forward.1} parent=1 // pred_fallthru
      _
    // Predicated region
    $region14: #{ff_forward.1} parent=1 // pred_check
      _
    $region15: #{ff_forward.1} parent=1 // pred_check_branch
      %46 = sbr.rel (0) target = $region17
    $region16: #{ff_forward.1} parent=1 // pred_region
      %48 = vsyncadd [#allocation6], 0
      %s49 = sshll.u32 %s3, 4
      %s50 = int_to_ptr.hbm [resolvable:$true] %s49
      %s51 = sshll.u32 [#allocation7], 4
      %s52 = int_to_ptr.vmem [resolvable:$true] %s51
      %57 = dma.hbm_to_vmem [thread:$0]  %s50, 2048, %s52, [#allocation6], 128, 128, 8
    $region17: #{ff_forward.1} parent=1 // pred_fallthru
      _
    // Predicated region
    $region18: #{ff_forward.1} parent=1 // pred_check
      _
    $region19: #{ff_forward.1} parent=1 // pred_check_branch
      %59 = sbr.rel (0) target = $region21
    $region20: #{ff_forward.1} parent=1 // pred_region
      %61 = vsyncadd [#allocation9], 0
      %s63 = sshll.u32 %s4, 4
      %s64 = int_to_ptr.hbm [resolvable:$true] %s63
      %s65 = sshll.u32 [#allocation8], 4
      %s66 = int_to_ptr.vmem [resolvable:$true] %s65
      %68 = dma.hbm_to_vmem [thread:$0]  %s64, 16, %s66, [#allocation9]
    $region21: #{ff_forward.1} parent=1 // pred_fallthru
      _
    // Predicated region
    $region22: #{ff_forward.1} parent=1 // pred_check
      _
    $region23: #{ff_forward.1} parent=1 // pred_check_branch
      %70 = sbr.rel (0) target = $region25
    $region24: #{ff_forward.1} parent=1 // pred_region
      %72 = vsyncadd [#allocation9], 0
      %s73 = sshll.u32 %s5, 4
      %s74 = int_to_ptr.hbm [resolvable:$true] %s73
      %s75 = sshll.u32 [#allocation10], 4
      %s76 = int_to_ptr.vmem [resolvable:$true] %s75
      %81 = dma.hbm_to_vmem [thread:$0]  %s74, 2048, %s76, [#allocation9], 128, 128, 8
    $region25: #{ff_forward.1} parent=1 // pred_fallthru
      _
    // Predicated region
    $region26: #{ff_forward.1} parent=1 // pred_check
      _
    $region27: #{ff_forward.1} parent=1 // pred_check_branch
      %83 = sbr.rel (0) target = $region29
    $region28: #{ff_forward.1} parent=1 // pred_region
      %85 = vsyncadd [#allocation12], 0
      %s87 = sshll.u32 %s6, 4
      %s88 = int_to_ptr.hbm [resolvable:$true] %s87
      %s89 = sshll.u32 [#allocation11], 4
      %s90 = int_to_ptr.vmem [resolvable:$true] %s89
      %92 = dma.hbm_to_vmem [thread:$0]  %s88, 16, %s90, [#allocation12]
    $region29: #{ff_forward.1} parent=1 // pred_fallthru
      _
    // Predicated region
    $region30: #{ff_forward.1} parent=1 // pred_check
      _
    $region31: #{ff_forward.1} parent=1 // pred_check_branch
      %94 = sbr.rel (0) target = $region33
    $region32: #{ff_forward.1} parent=1 // pred_region
      %96 = dma.done [#allocation3], 256
    $region33: #{ff_forward.1} parent=1 // pred_fallthru
      _
    // Predicated region
    $region34: #{ff_forward.1} parent=1 // pred_check
      _
    $region35: #{ff_forward.1} parent=1 // pred_check_branch
      %98 = sbr.rel (0) target = $region37
    $region36: #{ff_forward.1} parent=1 // pred_region
      %100 = dma.done [#allocation6], 1024
    $region37: #{ff_forward.1} parent=1 // pred_fallthru
      _
    // Predicated region
    $region38: #{ff_forward.1} parent=1 // pred_check
      _
    $region39: #{ff_forward.1} parent=1 // pred_check_branch
      %102 = sbr.rel (0) target = $region41
    $region40: #{ff_forward.1} parent=1 // pred_region
      %104 = dma.done [#allocation6], 2048
    $region41: #{ff_forward.1} parent=1 // pred_fallthru
      _
    // Predicated region
    $region42: #{ff_forward.1} parent=1 // pred_check
      _
    $region43: #{ff_forward.1} parent=1 // pred_check_branch
      %106 = sbr.rel (0) target = $region45
    $region44: #{ff_forward.1} parent=1 // pred_region
      %108 = dma.done [#allocation9], 16
    $region45: #{ff_forward.1} parent=1 // pred_fallthru
      _
    // Predicated region
    $region46: #{ff_forward.1} parent=1 // pred_check
      _
    $region47: #{ff_forward.1} parent=1 // pred_check_branch
      %110 = sbr.rel (0) target = $region49
    $region48: #{ff_forward.1} parent=1 // pred_region
      %112 = dma.done [#allocation9], 2048
    $region49: #{ff_forward.1} parent=1 // pred_fallthru
      _
    // Predicated region
    $region50: #{ff_forward.1} parent=1 // pred_check
      _
    $region51: #{ff_forward.1} parent=1 // pred_check_branch
      %114 = sbr.rel (0) target = $region53
    $region52: #{ff_forward.1} parent=1 // pred_region
      %116 = dma.done [#allocation12], 16
    $region53: #{ff_forward.1} parent=1 // pred_fallthru
      _
    %v117 = vld [vmem:[#allocation2] sm:$0xff]
    %v118 = vld [vmem:[#allocation2 + $0x8] sm:$0x3]
    %v119 = vld [vmem:[#allocation5] sm:$0xff]
    %v120 = vld [vmem:[#allocation5 + $0x8] sm:$0xff]
    %v121 = vld [vmem:[#allocation5 + $0x10] sm:$0xff]
    %v122 = vld [vmem:[#allocation5 + $0x18] sm:$0xff]
    %v123 = vld [vmem:[#allocation5 + $0x20] sm:$0xff]
    %v124 = vld [vmem:[#allocation5 + $0x28] sm:$0xff]
    %v125 = vld [vmem:[#allocation5 + $0x30] sm:$0xff]
    %v126 = vld [vmem:[#allocation5 + $0x38] sm:$0xff]
    %v127 = vld [vmem:[%s2] sm:$0x3]
    %v129 = vperm.slane %v127, 0
    %v130 = vperm.slane %v127, 1
    %vm133 = vcmask 261120
    %v135 = vsel %vm133, %v117, 0
    %v138 = vsel %vm133, %v118, 0
    %140 = vmatpush.msra.mxu0 0.0
    %141 = vmatpush.msra.mxu0 0.0
    %142 = vmatpush.msra.mxu0 0.0
    %143 = vmatpush.msra.mxu0 0.0
    %144 = vmatpush.msra.mxu0 0.0
    %145 = vmatpush.msra.mxu0 0.0
    %146 = vmatpush.msra.mxu0 0.0
    %147 = vmatpush.msra.mxu0 0.0
    %148 = vmatpush.msra.mxu0 0.0
    %149 = vmatpush.msra.mxu0 0.0
    %150 = vmatpush.msra.mxu0 0.0
    %151 = vmatpush.msra.mxu0 0.0
    %152 = vmatpush.msra.mxu0 %v125
    %153 = vmatpush.msra.mxu0 %v123
    %154 = vmatpush.msra.mxu0 %v121
    %155 = vmatpush.msra.mxu0 %v119
    %156 = vmatmul.f32.gmra.mxu0 %v135
    %v157 = vpop.f32.mrf.mxu0
    %v158 = vadd.f32 %v129, %v157
    %159 = vmatmul.f32.gmra.mxu0 %v138
    %v160 = vpop.f32.mrf.mxu0
    %v161 = vadd.f32 %v129, %v160
    %162 = vdwg.mxu0
    %163 = vmatpush.msra.mxu0 0.0
    %164 = vmatpush.msra.mxu0 0.0
    %165 = vmatpush.msra.mxu0 0.0
    %166 = vmatpush.msra.mxu0 0.0
    %167 = vmatpush.msra.mxu0 0.0
    %168 = vmatpush.msra.mxu0 0.0
    %169 = vmatpush.msra.mxu0 0.0
    %170 = vmatpush.msra.mxu0 0.0
    %171 = vmatpush.msra.mxu0 0.0
    %172 = vmatpush.msra.mxu0 0.0
    %173 = vmatpush.msra.mxu0 0.0
    %174 = vmatpush.msra.mxu0 0.0
    %175 = vmatpush.msra.mxu0 %v126
    %176 = vmatpush.msra.mxu0 %v124
    %177 = vmatpush.msra.mxu0 %v122
    %178 = vmatpush.msra.mxu0 %v120
    %179 = vmatmul.f32.gmra.mxu0 %v135
    %v180 = vpop.f32.mrf.mxu0
    %v181 = vadd.f32 %v130, %v180
    %182 = vmatmul.f32.gmra.mxu0 %v138
    %v183 = vpop.f32.mrf.mxu0
    %v184 = vadd.f32 %v130, %v183
    %185 = vdwg.mxu0
    %v186 = vmax.f32 %v158, 0.0
    %v187 = vmax.f32 %v161, 0.0
    %v188 = vld [vmem:[#allocation7] sm:$0xff]
    %v189 = vld [vmem:[#allocation7 + $0x8] sm:$0xff]
    %v190 = vld [vmem:[#allocation7 + $0x10] sm:$0xff]
    %v191 = vld [vmem:[#allocation7 + $0x18] sm:$0xff]
    %v192 = vld [vmem:[#allocation7 + $0x20] sm:$0xff]
    %v193 = vld [vmem:[#allocation7 + $0x28] sm:$0xff]
    %v194 = vld [vmem:[#allocation7 + $0x30] sm:$0xff]
    %v195 = vld [vmem:[#allocation7 + $0x38] sm:$0xff]
    %v196 = vld [vmem:[#allocation7 + $0x40] sm:$0xff]
    %v197 = vld [vmem:[#allocation7 + $0x48] sm:$0xff]
    %v198 = vld [vmem:[#allocation7 + $0x50] sm:$0xff]
    %v199 = vld [vmem:[#allocation7 + $0x58] sm:$0xff]
    %v200 = vld [vmem:[#allocation7 + $0x60] sm:$0xff]
    %v201 = vld [vmem:[#allocation7 + $0x68] sm:$0xff]
    %v202 = vld [vmem:[#allocation7 + $0x70] sm:$0xff]
    %v203 = vld [vmem:[#allocation7 + $0x78] sm:$0xff]
    %v204 = vld [vmem:[#allocation8] sm:$0x1]
    %v206 = vperm.slane %v204, 0
    %208 = vmatpush.msra.mxu0 %v203
    %209 = vmatpush.msra.mxu0 %v202
    %210 = vmatpush.msra.mxu0 %v201
    %211 = vmatpush.msra.mxu0 %v200
    %212 = vmatpush.msra.mxu0 %v199
    %213 = vmatpush.msra.mxu0 %v198
    %214 = vmatpush.msra.mxu0 %v197
    %215 = vmatpush.msra.mxu0 %v196
    %216 = vmatpush.msra.mxu0 %v195
    %217 = vmatpush.msra.mxu0 %v194
    %218 = vmatpush.msra.mxu0 %v193
    %219 = vmatpush.msra.mxu0 %v192
    %220 = vmatpush.msra.mxu0 %v191
    %221 = vmatpush.msra.mxu0 %v190
    %222 = vmatpush.msra.mxu0 %v189
    %223 = vmatpush.msra.mxu0 %v188
    %224 = vmatmul.f32.gmra.mxu0 %v186
    %v225 = vpop.f32.mrf.mxu0
    %v226 = vadd.f32 %v206, %v225
    %227 = vmatmul.f32.gmra.mxu0 %v187
    %v228 = vpop.f32.mrf.mxu0
    %v229 = vadd.f32 %v206, %v228
    %230 = vdwg.mxu0
    %v231 = vmax.f32 %v226, 0.0
    %v232 = vmax.f32 %v229, 0.0
    %v233 = vld [vmem:[#allocation10] sm:$0xff]
    %v234 = vld [vmem:[#allocation10 + $0x8] sm:$0xff]
    %v235 = vld [vmem:[#allocation10 + $0x10] sm:$0xff]
    %v236 = vld [vmem:[#allocation10 + $0x18] sm:$0xff]
    %v237 = vld [vmem:[#allocation10 + $0x20] sm:$0xff]
    %v238 = vld [vmem:[#allocation10 + $0x28] sm:$0xff]
    %v239 = vld [vmem:[#allocation10 + $0x30] sm:$0xff]
    %v240 = vld [vmem:[#allocation10 + $0x38] sm:$0xff]
    %v241 = vld [vmem:[#allocation10 + $0x40] sm:$0xff]
    %v242 = vld [vmem:[#allocation10 + $0x48] sm:$0xff]
    %v243 = vld [vmem:[#allocation10 + $0x50] sm:$0xff]
    %v244 = vld [vmem:[#allocation10 + $0x58] sm:$0xff]
    %v245 = vld [vmem:[#allocation10 + $0x60] sm:$0xff]
    %v246 = vld [vmem:[#allocation10 + $0x68] sm:$0xff]
    %v247 = vld [vmem:[#allocation10 + $0x70] sm:$0xff]
    %v248 = vld [vmem:[#allocation10 + $0x78] sm:$0xff]
    %v249 = vld [vmem:[#allocation11] sm:$0x1]
    %v251 = vperm.slane %v249, 0
    %253 = vmatpush.msra.mxu0 %v248
    %254 = vmatpush.msra.mxu0 %v247
    %255 = vmatpush.msra.mxu0 %v246
    %256 = vmatpush.msra.mxu0 %v245
    %257 = vmatpush.msra.mxu0 %v244
    %258 = vmatpush.msra.mxu0 %v243
    %259 = vmatpush.msra.mxu0 %v242
    %260 = vmatpush.msra.mxu0 %v241
    %261 = vmatpush.msra.mxu0 %v240
    %262 = vmatpush.msra.mxu0 %v239
    %263 = vmatpush.msra.mxu0 %v238
    %264 = vmatpush.msra.mxu0 %v237
    %265 = vmatpush.msra.mxu0 %v236
    %266 = vmatpush.msra.mxu0 %v235
    %267 = vmatpush.msra.mxu0 %v234
    %268 = vmatpush.msra.mxu0 %v233
    %269 = vmatmul.f32.gmra.mxu0 %v231
    %v270 = vpop.f32.mrf.mxu0
    %v271 = vadd.f32 %v251, %v270
    %272 = vmatmul.f32.gmra.mxu0 %v232
    %v273 = vpop.f32.mrf.mxu0
    %v274 = vadd.f32 %v251, %v273
    %275 = vdwg.mxu0
    %v276 = vmax.f32 %v271, 0.0
    %v277 = vmax.f32 %v274, 0.0
    %v278 = vadd.f32 %v276, %v181
    %v279 = vadd.f32 %v277, %v184
    %280 = vst.msk [vmem:[#allocation13] sm:$0xff] %vm133, %v278
    %vm281 = vcmask 254976
    %282 = vst.msk [vmem:[#allocation13 + $0x8] sm:$0x3] %vm281, %v279
    // Predicated region
    $region54: #{ff_forward.1} parent=1 // pred_check
      _
    $region55: #{ff_forward.1} parent=1 // pred_check_branch
      %284 = sbr.rel (0) target = $region57
    $region56: #{ff_forward.1} parent=1 // pred_region
      %286 = vsyncadd [#allocation4], 0
      %s287 = sshll.u32 [#allocation13], 4
      %s288 = int_to_ptr.vmem [resolvable:$true] %s287
      %s289 = sshll.u32 %s7, 4
      %s290 = int_to_ptr.hbm [resolvable:$true] %s289
      %295 = dma.vmem_to_hbm [thread:$0]  %s288, 256, %s290, [#allocation4], 128, 128, 8
    $region57: #{ff_forward.1} parent=1 // pred_fallthru
      _
    // Predicated region
    $region58: #{ff_forward.1} parent=1 // pred_check
      _
    $region59: #{ff_forward.1} parent=1 // pred_check_branch
      %297 = sbr.rel (0) target = $region61
    $region60: #{ff_forward.1} parent=1 // pred_region
      %299 = dma.done [#allocation4], 256
    $region61: #{ff_forward.1} parent=1 // pred_fallthru
      _
    %300 = vsyncpa [#allocation3], 1
    %301 = vsyncpa [#allocation6], 1
    %302 = vsyncpa [#allocation9], 1
    %303 = vsyncpa [#allocation12], 1
    %304 = vsyncpa [#allocation4], 1

</llo_original>
